<compile_context>
chip_gen: v6e
topology: v6e:2x2x1
jax: 0.10.0
libtpu: 0.0.40
codegen_flags: <defaults>
</compile_context>

<pallas_src>
import functools
import math

import jax
import jax.numpy as jnp
from jax.experimental import pallas as pl
from jax.experimental.pallas import tpu as pltpu


# ---------------------------------------------------------------------------
# Kernels
# ---------------------------------------------------------------------------
def _pe_add_kernel(x_ref, pe_ref, o_ref):
    # x: (ts, B, D), pe: (ts, 1, D) -> broadcast-add over the batch (sublane) axis.
    o_ref[...] = (x_ref[...] + pe_ref[...]).astype(o_ref.dtype)


def _pe_add_dropout_kernel(x_ref, pe_ref, u_ref, o_ref, *, rate, scale):
    # Fused (x + pe) and inverted dropout.  u is a uniform[0,1) f32 stream;
    # keep an element iff u >= rate, and rescale kept values by 1/(1-rate).
    y = x_ref[...] + pe_ref[...]                       # (ts, B, D)
    keep = u_ref[...] >= jnp.float32(rate)
    y = jnp.where(keep, y * jnp.array(scale, dtype=y.dtype), jnp.zeros_like(y))
    o_ref[...] = y.astype(o_ref.dtype)


# ---------------------------------------------------------------------------
# Buffer construction (mirrors PositionalEncoding.__init__)
# ---------------------------------------------------------------------------
def make_positional_encoding(max_len, d_model):
    position = jnp.arange(max_len, dtype=jnp.float32)[:, None]
    div_term = jnp.exp(jnp.arange(0, d_model, 2, dtype=jnp.float32)
                       * (-math.log(10000.0) / d_model))
    pe = jnp.zeros((max_len, d_model), jnp.float32)
    pe = pe.at[:, 0::2].set(jnp.sin(position * div_term))
    pe = pe.at[:, 1::2].set(jnp.cos(position * div_term))
    return pe[:, None, :]          # (max_len, 1, d_model), same as the buffer


# ---------------------------------------------------------------------------
# Tile sizing: target ~MiB-scale x blocks, never a whole-sequence block.
# ---------------------------------------------------------------------------
def _choose_seq_tile(S, B, D, itemsize, target_block_bytes):
    row_bytes = B * D * itemsize
    ts = max(1, target_block_bytes // row_bytes)
    ts = min(ts, S)
    if ts >= 8:                       # keep partial-tile masking cheap
        ts -= ts % 8
    return int(ts)


# ---------------------------------------------------------------------------
# Forward wrapper
# ---------------------------------------------------------------------------
def positional_encoding_forward(x, pe, *, dropout_rate=0.1, training=False,
                                rng=None, target_block_bytes=2 << 20):
    """x: (S, B, D); pe: (max_len, 1, D) registered buffer -> (S, B, D)."""
    S, B, D = x.shape
    assert pe.shape[0] >= S and pe.shape[-1] == D, (pe.shape, x.shape)

    ts = _choose_seq_tile(S, B, D, jnp.dtype(x.dtype).itemsize,
                          target_block_bytes)
    grid = (pl.cdiv(S, ts),)          # partial last tile is masked by Pallas
    out_shape = jax.ShapeDtypeStruct((S, B, D), x.dtype)

    compiler_params = pltpu.CompilerParams(
        dimension_semantics=("parallel",),   # tiles are independent on all paths
        vmem_limit_bytes=48 << 20,           # headroom for big double-buffered blocks
    )

    x_spec = pl.BlockSpec((ts, B, D), lambda i: (i, 0, 0))
    pe_spec = pl.BlockSpec((ts, 1, D), lambda i: (i, 0, 0))
    out_spec = pl.BlockSpec((ts, B, D), lambda i: (i, 0, 0))

    if (not training) or dropout_rate == 0.0:
        # Eval path: dropout is the identity.
        return pl.pallas_call(
            _pe_add_kernel,
            out_shape=out_shape,
            grid_spec=pltpu.PrefetchScalarGridSpec(
                num_scalar_prefetch=0,
                grid=grid,
                in_specs=[x_spec, pe_spec],
                out_specs=out_spec,
            ),
            compiler_params=compiler_params,
        )(x, pe)

    # Training path: fused inverted dropout.  The uniform stream is generated
    # by XLA outside the kernel so the kernel lowers on every backend.
    if rng is None:
        raise ValueError("training=True requires an rng key")
    u = jax.random.uniform(rng, (S, B, D), jnp.float32)
    scale = 1.0 / (1.0 - dropout_rate)
    kernel = functools.partial(_pe_add_dropout_kernel,
                               rate=float(dropout_rate), scale=float(scale))
    u_spec = pl.BlockSpec((ts, B, D), lambda i: (i, 0, 0))
    return pl.pallas_call(
        kernel,
        out_shape=out_shape,
        grid_spec=pltpu.PrefetchScalarGridSpec(
            num_scalar_prefetch=0,
            grid=grid,
            in_specs=[x_spec, pe_spec, u_spec],
            out_specs=out_spec,
        ),
        compiler_params=compiler_params,
    )(x, pe, u)


# ---------------------------------------------------------------------------
# Demo / self-test
# ---------------------------------------------------------------------------
if __name__ == "__main__":
    d_model, max_len = 128, 512      # lane-dense last dim (multiple of 128)
    S, B = 72, 8                     # S not a multiple of the tile -> partial tile
    dropout = 0.1

    root = jax.random.PRNGKey(0)
    kx, kd = jax.random.split(root)
    x = jax.random.normal(kx, (S, B, d_model), jnp.float32)
    pe = make_positional_encoding(max_len, d_model)

    # Small block target so the demo exercises a multi-step grid + partial tile.
    small_block = 64 << 10

    # ---- eval path (dropout off): must match the pure-JAX reference --------
    out_eval = positional_encoding_forward(x, pe, dropout_rate=dropout,
                                           training=False,
                                           target_block_bytes=small_block)
    out_eval = jax.block_until_ready(out_eval)
    ref = x + pe[:S]                              # broadcast over batch
    assert out_eval.shape == (S, B, d_model), out_eval.shape
    max_err = float(jnp.max(jnp.abs(out_eval - ref)))
    assert max_err < 1e-5, f"eval mismatch vs reference: {max_err}"

    # ---- training path (fused inverted dropout) -----------------------------
    # TODO(synk): PyTorch's exact dropout RNG stream is not reproducible in JAX;
    # we check against the identical jax.random uniform stream instead.
    out_train = positional_encoding_forward(x, pe, dropout_rate=dropout,
                                            training=True, rng=kd,
                                            target_block_bytes=small_block)
    out_train = jax.block_until_ready(out_train)
    u = jax.random.uniform(kd, (S, B, d_model), jnp.float32)
    keep = u >= dropout
    ref_train = jnp.where(keep, ref * (1.0 / (1.0 - dropout)), 0.0)
    train_err = float(jnp.max(jnp.abs(out_train - ref_train)))
    assert train_err < 1e-4, f"train mismatch vs reference: {train_err}"
    frac = float(jnp.mean((~keep).astype(jnp.float32)))
    assert abs(frac - dropout) < 0.02, f"drop fraction {frac} far from {dropout}"

    print("KERNEL_OK")
</pallas_src>

<mosaic_0001>
module attributes {stable_mosaic.version = 11 : i64} {
  func.func @_pe_add_kernel(%arg0: i32, %arg1: memref<16x8x128xf32, #tpu.memory_space<vmem>>, %arg2: memref<16x1x128xf32, #tpu.memory_space<vmem>>, %arg3: memref<16x8x128xf32, #tpu.memory_space<vmem>>) attributes {dimension_semantics = [#tpu.dimension_semantics<parallel>], iteration_bounds = array<i64: 5>, scalar_prefetch = 0 : i64, scratch_operands = 0 : i64, tpu.core_type = #tpu.core_type<tc>, window_params = [{transform_indices = @transform_0, window_bounds = array<i64: 16, 8, 128>}, {transform_indices = @transform_1, window_bounds = array<i64: 16, 1, 128>}, {transform_indices = @transform_2, window_bounds = array<i64: 16, 8, 128>}]} {
    %c0 = arith.constant 0 : index
    %c0_0 = arith.constant 0 : index
    %c0_1 = arith.constant 0 : index
    %0 = vector.load %arg1[%c0, %c0_0, %c0_1] : memref<16x8x128xf32, #tpu.memory_space<vmem>>, vector<16x8x128xf32>
    %c0_2 = arith.constant 0 : index
    %c0_3 = arith.constant 0 : index
    %c0_4 = arith.constant 0 : index
    %1 = vector.load %arg2[%c0_2, %c0_3, %c0_4] : memref<16x1x128xf32, #tpu.memory_space<vmem>>, vector<16x1x128xf32>
    %2 = vector.broadcast %1 : vector<16x1x128xf32> to vector<16x8x128xf32>
    %3 = arith.addf %0, %2 : vector<16x8x128xf32>
    %c0_5 = arith.constant 0 : index
    %c0_6 = arith.constant 0 : index
    %c0_7 = arith.constant 0 : index
    %4 = vector.load %arg3[%c0_5, %c0_6, %c0_7] : memref<16x8x128xf32, #tpu.memory_space<vmem>>, vector<16x8x128xf32>
    tpu.vector_store %arg3[%c0_5, %c0_6, %c0_7], %3 {strides = array<i32>} : memref<16x8x128xf32, #tpu.memory_space<vmem>>, vector<16x8x128xf32>,
    return
  }
  func.func @transform_0(%arg0: i32) -> (i32, i32, i32) {
    %c0_i32 = arith.constant 0 : i32
    %c0_i32_0 = arith.constant 0 : i32
    %c0_i32_1 = arith.constant 0 : i32
    return %arg0, %c0_i32, %c0_i32_0 : i32, i32, i32
  }
  func.func @transform_1(%arg0: i32) -> (i32, i32, i32) {
    %c0_i32 = arith.constant 0 : i32
    %c0_i32_0 = arith.constant 0 : i32
    %c0_i32_1 = arith.constant 0 : i32
    return %arg0, %c0_i32, %c0_i32_0 : i32, i32, i32
  }
  func.func @transform_2(%arg0: i32) -> (i32, i32, i32) {
    %c0_i32 = arith.constant 0 : i32
    %c0_i32_0 = arith.constant 0 : i32
    %c0_i32_1 = arith.constant 0 : i32
    return %arg0, %c0_i32, %c0_i32_0 : i32, i32, i32
  }
}

</mosaic_0001>

<llo_original>
// kernel: tpu_custom_call.1
$region0: #{tpu_custom_call.1}
  #allocation0 [shape = 'u32[]', space=smem, size = 0x4, offset = 0x4, fixed_abs, tag = 'smem constant byte address 0x4 - core index']
  #allocation1 [shape = 'u32[144,128]{1,0:T(1,128)}', space=vmem, size = 0x12000, scoped, tag = 'internal scratch']
  %s0 = inlined_call_operand.hbm [shape: f32[72,8,128], index: 0, kind: input, shape index: {}]
  %s1 = inlined_call_operand.hbm [shape: f32[512,1,128], index: 1, kind: input, shape index: {}]
  %s2 = inlined_call_operand.hbm [shape: f32[72,8,128], index: 2, kind: output, shape index: {}]
  %s3 = sld [smem:[#allocation0]]
  $region49: #{tpu_custom_call.1} parent=0
    _
  %s5 = ssub.s32 1, %s3
  %s6 = scalar_select 0, %s5, %s3
  $region1: #{tpu_custom_call.1} parent=0
    #allocation2 [shape = 'u8[131072]{0}', space=vmem, size = 0x20000, scoped, tag = 'input window, operand 0']
    #allocation3 [shape = 's32[2]{0}', space=sflag, size = 0x8, scoped, tag = 'scoped memory for tpu_custom_call.1']
    #allocation4 [shape = 's32[2]{0}', space=sflag, size = 0x8, scoped, tag = 'scoped memory for tpu_custom_call.1']
    #allocation5 [shape = 'u8[16384]{0}', space=vmem, size = 0x4000, scoped, tag = 'input window, operand 1']
    #allocation6 [shape = 's32[2]{0}', space=sflag, size = 0x8, scoped, tag = 'scoped memory for tpu_custom_call.1']
    #allocation7 [shape = 'u8[131072]{0}', space=vmem, size = 0x20000, scoped, tag = 'output window, operand 0']
    %7 = vsyncpa [#allocation3], 0
    %s8 = scalar_lea.sflag [#allocation3], 1
    %9 = vsyncpa %s8, 0
    %10 = vsyncpa [#allocation6], 0
    %s11 = scalar_lea.sflag [#allocation6], 1
    %12 = vsyncpa %s11, 0
    %13 = vsyncpa [#allocation4], 0
    %s14 = scalar_lea.sflag [#allocation4], 1
    %15 = vsyncpa %s14, 0
    loop: start=0, step=1, limit=7
    $region2: #{tpu_custom_call.1} parent=1 // loop_pre_header
      _
    $region3: #{tpu_custom_call.1} parent=1 // loop_header
      %s17 = sphi 0, %s21
      %p18 = scmp.ge.s32.totalorder %s17, 7
      %s27 = sphi 0, %s29
      %s30 = sphi 0, %s27
      %s31 = sphi 0, %s30
      %s47 = sphi 0, %s31
      %s53 = sphi 0, %s55
      %s56 = sphi 0, %s53
      %s57 = sphi 0, %s56
      %s73 = sphi 0, %s57
      %s79 = sphi 0, %s81
      %s82 = sphi 0, %s79
      %s83 = sphi 0, %s82
      %s99 = sphi 0, %s83
    $region4: #{tpu_custom_call.1} parent=1 // loop_header_branch
      %20 = sbr.rel (%p18) target = $region8
    $region5: #{tpu_custom_call.1} parent=1 // loop_body
      %s22 = ssub.s32 %s17, 1
      %s23 = ssub.s32 %s17, 2
      %s24 = sadd.s32 %s17, 1
      %s25 = ssub.s32 %s17, %s24
      %p26 = scmp.eq.s32.totalorder %s25, 0
      %s28 = sadd.s32 %s27, 1
      %s29 = scalar_select %p26, %s27, %s28
      %p32 = pneg %p26
      %p33 = scmp.eq.s32.totalorder %s17, 4
      %p34 = por %p32, %p33
      %p35 = scmp.ne.s32.totalorder %s27, %s30
      %p36 = scmp.eq.s32.totalorder %s17, 0
      %p37 = por %p35, %p36
      %p38 = scmp.ne.s32.totalorder %s27, %s30
      %p39 = scmp.eq.s32.totalorder %s22, 4
      %p40 = por %p38, %p39
      %p41 = scmp.ne.s32.totalorder %s30, %s31
      %p42 = scmp.eq.s32.totalorder %s22, 0
      %p43 = por %p41, %p42
      %p44 = scmp.ne.s32.totalorder %s30, %s31
      %p45 = scmp.eq.s32.totalorder %s23, 4
      %p46 = por %p44, %p45
      %p48 = scmp.ne.s32.totalorder %s31, %s47
      %p49 = scmp.eq.s32.totalorder %s23, 0
      %p50 = por %p48, %p49
      %s51 = ssub.s32 %s17, %s24
      %p52 = scmp.eq.s32.totalorder %s51, 0
      %s54 = sadd.s32 %s53, 1
      %s55 = scalar_select %p52, %s53, %s54
      %p58 = pneg %p52
      %p59 = scmp.eq.s32.totalorder %s17, 4
      %p60 = por %p58, %p59
      %p61 = scmp.ne.s32.totalorder %s53, %s56
      %p62 = scmp.eq.s32.totalorder %s17, 0
      %p63 = por %p61, %p62
      %p64 = scmp.ne.s32.totalorder %s53, %s56
      %p65 = scmp.eq.s32.totalorder %s22, 4
      %p66 = por %p64, %p65
      %p67 = scmp.ne.s32.totalorder %s56, %s57
      %p68 = scmp.eq.s32.totalorder %s22, 0
      %p69 = por %p67, %p68
      %p70 = scmp.ne.s32.totalorder %s56, %s57
      %p71 = scmp.eq.s32.totalorder %s23, 4
      %p72 = por %p70, %p71
      %p74 = scmp.ne.s32.totalorder %s57, %s73
      %p75 = scmp.eq.s32.totalorder %s23, 0
      %p76 = por %p74, %p75
      %s77 = ssub.s32 %s17, %s24
      %p78 = scmp.eq.s32.totalorder %s77, 0
      %s80 = sadd.s32 %s79, 1
      %s81 = scalar_select %p78, %s79, %s80
      %p84 = pneg %p78
      %p85 = scmp.eq.s32.totalorder %s17, 4
      %p86 = por %p84, %p85
      %p87 = scmp.ne.s32.totalorder %s79, %s82
      %p88 = scmp.eq.s32.totalorder %s17, 0
      %p89 = por %p87, %p88
      %p90 = scmp.ne.s32.totalorder %s79, %s82
      %p91 = scmp.eq.s32.totalorder %s22, 4
      %p92 = por %p90, %p91
      %p93 = scmp.ne.s32.totalorder %s82, %s83
      %p94 = scmp.eq.s32.totalorder %s22, 0
      %p95 = por %p93, %p94
      %p96 = scmp.ne.s32.totalorder %s82, %s83
      %p97 = scmp.eq.s32.totalorder %s23, 4
      %p98 = por %p96, %p97
      %p100 = scmp.ne.s32.totalorder %s83, %s99
      %p101 = scmp.eq.s32.totalorder %s23, 0
      %p102 = por %p100, %p101
      %p103 = scmp.le.s32.totalorder 1, %s17
      %p104 = scmp.lt.s32.totalorder %s17, 6
      %p105 = pnand %p103, %p104
      %p106 = pneg %p105
      // Predicated region
      $region9: #{tpu_custom_call.1} parent=5 // pred_check
        _
      $region10: #{tpu_custom_call.1} parent=5 // pred_check_branch
        %108 = sbr.rel (%p105) target = $region12
      $region11: #{tpu_custom_call.1} parent=5 // pred_region
        %s109 = ssub.s32 %s17, 1
      $region12: #{tpu_custom_call.1} parent=5 // pred_fallthru
        _
      %p110 = scmp.lt.s32.totalorder %s17, 5
      // Predicated region
      $region13: #{tpu_custom_call.1} parent=5 // pred_check
        %p111 = pneg %p110
      $region14: #{tpu_custom_call.1} parent=5 // pred_check_branch
        %113 = sbr.rel (%p111) target = $region16
      $region15: #{tpu_custom_call.1} parent=5 // pred_region
        // Predicated region
        $region17: #{tpu_custom_call.1} parent=15 // pred_check
          %p114 = pneg %p37
        $region18: #{tpu_custom_call.1} parent=15 // pred_check_branch
          %116 = sbr.rel (%p114) target = $region20
        $region19: #{tpu_custom_call.1} parent=15 // pred_region
          %s117 = sand.u32 %s27, 1
          %s118 = scalar_lea.sflag [#allocation3], %s117
          %s119 = sand.u32 %s27, 1
          %s120 = smul.addr %s119, 128
          %s121 = scalar_lea.vmem [#allocation2], %s120
          %s122 = smul.u32 16, %s17
          %s123 = ssub.s32 72, %s122
          %p124 = scmp.lt.s32.totalorder %s123, 16
          %s125 = scalar_select %p124, %s123, 16
          %s126 = smul.u32 128, %s125
          %s128 = ssub.s32 2048, %s126
          %129 = vsyncadd %s118, %s128
          %p130 = scmp.ne.s32.totalorder 0, %s126
          %s131 = smul.addr %s122, 128
          %s132 = scalar_lea.hbm %s0, %s131
          %s133 = smul.u32 8, %s125
          %s134 = sshll.u32 %s121, 4
          %s135 = int_to_ptr.vmem [resolvable:$true] %s134
          %s136 = sshll.u32 %s133, 4
          %140 = dma.hbm_to_vmem [thread:$0]  (%p130), %s132, %s136, %s135, %s118, 128, 128, 8
        $region20: #{tpu_custom_call.1} parent=15 // pred_fallthru
          _
        // Predicated region
        $region21: #{tpu_custom_call.1} parent=15 // pred_check
          %p141 = pneg %p63
        $region22: #{tpu_custom_call.1} parent=15 // pred_check_branch
          %143 = sbr.rel (%p141) target = $region24
        $region23: #{tpu_custom_call.1} parent=15 // pred_region
          %s144 = sand.u32 %s53, 1
          %s145 = scalar_lea.sflag [#allocation6], %s144
          %s146 = sand.u32 %s53, 1
          %s147 = smul.addr %s146, 16
          %s148 = scalar_lea.vmem [#allocation5], %s147
          %s149 = smul.u32 16, %s17
          %s151 = ssub.s32 256, 256
          %152 = vsyncadd %s145, %s151
          %s153 = smul.addr %s149, 16
          %s154 = scalar_lea.hbm %s1, %s153
          %s155 = sshll.u32 %s148, 4
          %s156 = int_to_ptr.vmem [resolvable:$true] %s155
          %161 = dma.hbm_to_vmem [thread:$0]  %s154, 256, %s156, %s145, 16, 16, 1
        $region24: #{tpu_custom_call.1} parent=15 // pred_fallthru
          _
      $region16: #{tpu_custom_call.1} parent=5 // pred_fallthru
        _
      %p162 = scmp.le.s32.totalorder 1, %s17
      %p163 = scmp.lt.s32.totalorder %s17, 6
      %p164 = pnand %p162, %p163
      %p165 = pneg %p164
      // Predicated region
      $region25: #{tpu_custom_call.1} parent=5 // pred_check
        _
      $region26: #{tpu_custom_call.1} parent=5 // pred_check_branch
        %167 = sbr.rel (%p164) target = $region28
      $region27: #{tpu_custom_call.1} parent=5 // pred_region
        %s168 = ssub.s32 %s17, 1
        %s169 = sand.u32 %s30, 1
        %s170 = scalar_lea.sflag [#allocation3], %s169
        %s171 = sand.u32 %s30, 1
        %s172 = smul.addr %s171, 128
        %s173 = scalar_lea.vmem [#allocation2], %s172
        // Predicated region
        $region29: #{tpu_custom_call.1} parent=27 // pred_check
          %p174 = pneg %p43
        $region30: #{tpu_custom_call.1} parent=27 // pred_check_branch
          %176 = sbr.rel (%p174) target = $region32
        $region31: #{tpu_custom_call.1} parent=27 // pred_region
          %177 = dma.done %s170, 2048
        $region32: #{tpu_custom_call.1} parent=27 // pred_fallthru
          _
        %s178 = sand.u32 %s56, 1
        %s179 = scalar_lea.sflag [#allocation6], %s178
        %s180 = sand.u32 %s56, 1
        %s181 = smul.addr %s180, 16
        %s182 = scalar_lea.vmem [#allocation5], %s181
        // Predicated region
        $region33: #{tpu_custom_call.1} parent=27 // pred_check
          %p183 = pneg %p69
        $region34: #{tpu_custom_call.1} parent=27 // pred_check_branch
          %185 = sbr.rel (%p183) target = $region36
        $region35: #{tpu_custom_call.1} parent=27 // pred_region
          %186 = dma.done %s179, 256
        $region36: #{tpu_custom_call.1} parent=27 // pred_fallthru
          _
        %s187 = sand.u32 %s30, 1
        %s188 = scalar_lea.sflag [#allocation3], %s187
        %s189 = sand.u32 %s30, 1
        %s190 = smul.addr %s189, 128
        %s191 = scalar_lea.vmem [#allocation2], %s190
        %p192 = pneg %p43
        %p193 = pneg %p40
        %s194 = sand.u32 %s56, 1
        %s195 = scalar_lea.sflag [#allocation6], %s194
        %s196 = sand.u32 %s56, 1
        %s197 = smul.addr %s196, 16
        %s198 = scalar_lea.vmem [#allocation5], %s197
        %p199 = pneg %p69
        %p200 = pneg %p66
        %p201 = pneg %p95
        %p202 = pneg %p92
        %s203 = sand.u32 %s82, 1
        %s204 = scalar_lea.sflag [#allocation4], %s203
        %s205 = sand.u32 %s82, 1
        %s206 = smul.addr %s205, 128
        %s207 = scalar_lea.vmem [#allocation7], %s206
        %s208 = smul.u32 16, %s22
        %s209 = ssub.s32 72, %s208
        %p210 = scmp.lt.s32.totalorder %s209, 16
        %s211 = scalar_select %p210, %s209, 16
        %s212 = smul.u32 128, %s211
        %s213 = smul.u32 16, %s22
        %s214 = smul.u32 16, %s22
        %s215 = ssub.s32 72, %s214
        %p216 = scmp.lt.s32.totalorder %s215, 16
        %s217 = scalar_select %p216, %s215, 16
        %s218 = smul.u32 128, %s217
        %v219 = vld [vmem:[%s173] sm:$0xff]
        %v220 = vld [vmem:[%s173 + $0x8] sm:$0xff]
        %v221 = vld [vmem:[%s173 + $0x10] sm:$0xff]
        %v222 = vld [vmem:[%s173 + $0x18] sm:$0xff]
        %v223 = vld [vmem:[%s173 + $0x20] sm:$0xff]
        %v224 = vld [vmem:[%s173 + $0x28] sm:$0xff]
        %v225 = vld [vmem:[%s173 + $0x30] sm:$0xff]
        %v226 = vld [vmem:[%s173 + $0x38] sm:$0xff]
        %v227 = vld [vmem:[%s173 + $0x40] sm:$0xff]
        %v228 = vld [vmem:[%s173 + $0x48] sm:$0xff]
        %v229 = vld [vmem:[%s173 + $0x50] sm:$0xff]
        %v230 = vld [vmem:[%s173 + $0x58] sm:$0xff]
        %v231 = vld [vmem:[%s173 + $0x60] sm:$0xff]
        %v232 = vld [vmem:[%s173 + $0x68] sm:$0xff]
        %v233 = vld [vmem:[%s173 + $0x70] sm:$0xff]
        %v234 = vld [vmem:[%s173 + $0x78] sm:$0xff]
        %v235 = vld [vmem:[%s182] sm:$0x1]
        %v236 = vld [vmem:[%s182 + $0x1] sm:$0x1]
        %v237 = vld [vmem:[%s182 + $0x2] sm:$0x1]
        %v238 = vld [vmem:[%s182 + $0x3] sm:$0x1]
        %v239 = vld [vmem:[%s182 + $0x4] sm:$0x1]
        %v240 = vld [vmem:[%s182 + $0x5] sm:$0x1]
        %v241 = vld [vmem:[%s182 + $0x6] sm:$0x1]
        %v242 = vld [vmem:[%s182 + $0x7] sm:$0x1]
        %v243 = vld [vmem:[%s182 + $0x8] sm:$0x1]
        %v244 = vld [vmem:[%s182 + $0x9] sm:$0x1]
        %v245 = vld [vmem:[%s182 + $0xa] sm:$0x1]
        %v246 = vld [vmem:[%s182 + $0xb] sm:$0x1]
        %v247 = vld [vmem:[%s182 + $0xc] sm:$0x1]
        %v248 = vld [vmem:[%s182 + $0xd] sm:$0x1]
        %v249 = vld [vmem:[%s182 + $0xe] sm:$0x1]
        %v250 = vld [vmem:[%s182 + $0xf] sm:$0x1]
        %v267 = vlaneseq
        %v268 = vshrl.u32 %v267, 7
        %v269 = vsub.s32 0, %v268
        %v270 = vrot.slane %v235, %v269
        %v271 = vlaneseq
        %v272 = vshrl.u32 %v271, 7
        %v273 = vsub.s32 0, %v272
        %v274 = vrot.slane %v236, %v273
        %v275 = vlaneseq
        %v276 = vshrl.u32 %v275, 7
        %v277 = vsub.s32 0, %v276
        %v278 = vrot.slane %v237, %v277
        %v279 = vlaneseq
        %v280 = vshrl.u32 %v279, 7
        %v281 = vsub.s32 0, %v280
        %v282 = vrot.slane %v238, %v281
        %v283 = vlaneseq
        %v284 = vshrl.u32 %v283, 7
        %v285 = vsub.s32 0, %v284
        %v286 = vrot.slane %v239, %v285
        %v287 = vlaneseq
        %v288 = vshrl.u32 %v287, 7
        %v289 = vsub.s32 0, %v288
        %v290 = vrot.slane %v240, %v289
        %v291 = vlaneseq
        %v292 = vshrl.u32 %v291, 7
        %v293 = vsub.s32 0, %v292
        %v294 = vrot.slane %v241, %v293
        %v295 = vlaneseq
        %v296 = vshrl.u32 %v295, 7
        %v297 = vsub.s32 0, %v296
        %v298 = vrot.slane %v242, %v297
        %v299 = vlaneseq
        %v300 = vshrl.u32 %v299, 7
        %v301 = vsub.s32 0, %v300
        %v302 = vrot.slane %v243, %v301
        %v303 = vlaneseq
        %v304 = vshrl.u32 %v303, 7
        %v305 = vsub.s32 0, %v304
        %v306 = vrot.slane %v244, %v305
        %v307 = vlaneseq
        %v308 = vshrl.u32 %v307, 7
        %v309 = vsub.s32 0, %v308
        %v310 = vrot.slane %v245, %v309
        %v311 = vlaneseq
        %v312 = vshrl.u32 %v311, 7
        %v313 = vsub.s32 0, %v312
        %v314 = vrot.slane %v246, %v313
        %v315 = vlaneseq
        %v316 = vshrl.u32 %v315, 7
        %v317 = vsub.s32 0, %v316
        %v318 = vrot.slane %v247, %v317
        %v319 = vlaneseq
        %v320 = vshrl.u32 %v319, 7
        %v321 = vsub.s32 0, %v320
        %v322 = vrot.slane %v248, %v321
        %v323 = vlaneseq
        %v324 = vshrl.u32 %v323, 7
        %v325 = vsub.s32 0, %v324
        %v326 = vrot.slane %v249, %v325
        %v327 = vlaneseq
        %v328 = vshrl.u32 %v327, 7
        %v329 = vsub.s32 0, %v328
        %v330 = vrot.slane %v250, %v329
        %v347 = vadd.f32 %v219, %v270
        %v348 = vadd.f32 %v220, %v274
        %v349 = vadd.f32 %v221, %v278
        %v350 = vadd.f32 %v222, %v282
        %v351 = vadd.f32 %v223, %v286
        %v352 = vadd.f32 %v224, %v290
        %v353 = vadd.f32 %v225, %v294
        %v354 = vadd.f32 %v226, %v298
        %v355 = vadd.f32 %v227, %v302
        %v356 = vadd.f32 %v228, %v306
        %v357 = vadd.f32 %v229, %v310
        %v358 = vadd.f32 %v230, %v314
        %v359 = vadd.f32 %v231, %v318
        %v360 = vadd.f32 %v232, %v322
        %v361 = vadd.f32 %v233, %v326
        %v362 = vadd.f32 %v234, %v330
        %363 = vst [vmem:[%s207] sm:$0xff] %v347
        %364 = vst [vmem:[%s207 + $0x8] sm:$0xff] %v348
        %365 = vst [vmem:[%s207 + $0x10] sm:$0xff] %v349
        %366 = vst [vmem:[%s207 + $0x18] sm:$0xff] %v350
        %367 = vst [vmem:[%s207 + $0x20] sm:$0xff] %v351
        %368 = vst [vmem:[%s207 + $0x28] sm:$0xff] %v352
        %369 = vst [vmem:[%s207 + $0x30] sm:$0xff] %v353
        %370 = vst [vmem:[%s207 + $0x38] sm:$0xff] %v354
        %371 = vst [vmem:[%s207 + $0x40] sm:$0xff] %v355
        %372 = vst [vmem:[%s207 + $0x48] sm:$0xff] %v356
        %373 = vst [vmem:[%s207 + $0x50] sm:$0xff] %v357
        %374 = vst [vmem:[%s207 + $0x58] sm:$0xff] %v358
        %375 = vst [vmem:[%s207 + $0x60] sm:$0xff] %v359
        %376 = vst [vmem:[%s207 + $0x68] sm:$0xff] %v360
        %377 = vst [vmem:[%s207 + $0x70] sm:$0xff] %v361
        %378 = vst [vmem:[%s207 + $0x78] sm:$0xff] %v362
        %s379 = sand.u32 %s82, 1
        %s380 = scalar_lea.sflag [#allocation4], %s379
        %s381 = sand.u32 %s82, 1
        %s382 = smul.addr %s381, 128
        %s383 = scalar_lea.vmem [#allocation7], %s382
        // Predicated region
        $region37: #{tpu_custom_call.1} parent=27 // pred_check
          %p384 = pneg %p92
        $region38: #{tpu_custom_call.1} parent=27 // pred_check_branch
          %386 = sbr.rel (%p384) target = $region40
        $region39: #{tpu_custom_call.1} parent=27 // pred_region
          %s387 = smul.u32 16, %s22
          %s388 = ssub.s32 72, %s387
          %p389 = scmp.lt.s32.totalorder %s388, 16
          %s390 = scalar_select %p389, %s388, 16
          %s391 = smul.u32 128, %s390
          %s393 = ssub.s32 2048, %s391
          %394 = vsyncadd %s380, %s393
          %p395 = scmp.ne.s32.totalorder 0, %s391
          %s396 = smul.addr %s387, 128
          %s397 = scalar_lea.hbm %s2, %s396
          %s398 = smul.u32 8, %s390
          %s399 = sshll.u32 %s383, 4
          %s400 = int_to_ptr.vmem [resolvable:$true] %s399
          %s401 = sshll.u32 %s398, 4
          %405 = dma.vmem_to_hbm [thread:$0]  (%p395), %s400, %s401, %s397, %s380, 128, 128, 8
        $region40: #{tpu_custom_call.1} parent=27 // pred_fallthru
          _
      $region28: #{tpu_custom_call.1} parent=5 // pred_fallthru
        _
      %p406 = scmp.le.s32.totalorder 2, %s17
      // Predicated region
      $region41: #{tpu_custom_call.1} parent=5 // pred_check
        %p407 = pneg %p406
      $region42: #{tpu_custom_call.1} parent=5 // pred_check_branch
        %409 = sbr.rel (%p407) target = $region44
      $region43: #{tpu_custom_call.1} parent=5 // pred_region
        %s410 = ssub.s32 %s17, 2
        // Predicated region
        $region45: #{tpu_custom_call.1} parent=43 // pred_check
          %p411 = pneg %p98
        $region46: #{tpu_custom_call.1} parent=43 // pred_check_branch
          %413 = sbr.rel (%p411) target = $region48
        $region47: #{tpu_custom_call.1} parent=43 // pred_region
          %s414 = sand.u32 %s83, 1
          %s415 = scalar_lea.sflag [#allocation4], %s414
          %s416 = sand.u32 %s83, 1
          %s417 = smul.addr %s416, 128
          %s418 = scalar_lea.vmem [#allocation7], %s417
          %419 = dma.done %s415, 2048
        $region48: #{tpu_custom_call.1} parent=43 // pred_fallthru
          _
      $region44: #{tpu_custom_call.1} parent=5 // pred_fallthru
        _
    $region6: #{tpu_custom_call.1} parent=1 // loop_footer
      %s21 = sadd.s32 1, %s17
    $region7: #{tpu_custom_call.1} parent=1 // loop_footer_branch
      %16 = sbr.rel target = $region3
    $region8: #{tpu_custom_call.1} parent=1 // loop_exit
      _
    %420 = vsyncpa [#allocation3], 1
    %s421 = scalar_lea.sflag [#allocation3], 1
    %422 = vsyncpa %s421, 1
    %423 = vsyncpa [#allocation6], 1
    %s424 = scalar_lea.sflag [#allocation6], 1
    %425 = vsyncpa %s424, 1
    %426 = vsyncpa [#allocation4], 1
    %s427 = scalar_lea.sflag [#allocation4], 1
    %428 = vsyncpa %s427, 1

</llo_original>
